<compile_context>
chip_gen: v7x
topology: tpu7x:2x2x1
jax: 0.10.0
libtpu: 0.0.40
codegen_flags: <defaults>
</compile_context>

<pallas_src>
import functools
import math

import jax
import jax.numpy as jnp
from jax.experimental import pallas as pl
from jax.experimental.pallas import tpu as pltpu

_LANE = 128
_SUBLANE = 8


def _round_up(x, m):
    return (x + m - 1) // m * m


# ----------------------------------------------------------------------------
# FNN kernel: hid = relu(x @ W1 + b1); out = hid @ W2 + b2; y = LN(out + x)
# Operates on lane-padded (tile_n, d_pad)/(d_pad, h_pad) tiles; all padded
# lanes of x/W/b are zero, so matmul results and residual are exact and the
# padded lanes of `y` are exactly zero.
# ----------------------------------------------------------------------------
def _fnn_kernel(x_ref, w1_ref, b1_ref, w2_ref, b2_ref, g_ref, beta_ref, o_ref,
                *, d_true, eps):
    x = x_ref[...]
    # Keep a f32 copy only if the MXU inputs are lower precision (bf16 path).
    x_f32 = x if x.dtype == jnp.float32 else x.astype(jnp.float32)

    hid = jnp.dot(x, w1_ref[...], preferred_element_type=jnp.float32) + b1_ref[...]
    hid = jnp.maximum(hid, 0.0)                                    # ReLU
    out = (jnp.dot(hid.astype(w2_ref.dtype), w2_ref[...],
                   preferred_element_type=jnp.float32) + b2_ref[...])
    y = out + x_f32                                                # residual (f32)

    # LayerNorm over the TRUE feature count (padded lanes of y are zero, so the
    # plain lane-sum already equals the sum over the d_true real features; the
    # variance uses a lane mask so the padded (0 - mean)^2 terms don't leak in).
    inv_d = 1.0 / d_true
    mean = jnp.sum(y, axis=-1, keepdims=True) * inv_d
    lane = jax.lax.broadcasted_iota(jnp.int32, y.shape, dimension=1)
    diff = jnp.where(lane < d_true, y - mean, 0.0)
    var = jnp.sum(diff * diff, axis=-1, keepdims=True) * inv_d
    norm = diff * jax.lax.rsqrt(var + eps)
    o_ref[...] = (norm * g_ref[...] + beta_ref[...]).astype(o_ref.dtype)


def fnn_forward(x, params, *, tile_n=512, matmul_dtype=None):
    """FNN.forward: layernorm(linear2(relu(linear1(x))) + x).

    x: (..., D) with any number of leading dims.  `params` holds nn.Linear
    weights pre-transposed to (in, out) layout plus LayerNorm gamma/beta.
    `matmul_dtype=jnp.bfloat16` enables bf16 MXU inputs (f32 accumulation and
    f32 LayerNorm epilogue are kept).
    """
    w1, b1, w2, b2, gamma, beta = params
    orig_shape = x.shape
    d = orig_shape[-1]
    h = w1.shape[1]
    assert w1.shape == (d, h) and w2.shape == (h, d)

    x2d = x.reshape(-1, d)
    n = x2d.shape[0]

    # Lane-pad feature dims to 128 and row-pad to a multiple of the row tile.
    d_pad = _round_up(d, _LANE)
    h_pad = _round_up(h, _LANE)
    tile_n = _round_up(min(tile_n, _round_up(n, _SUBLANE)), _SUBLANE)
    n_pad = _round_up(n, tile_n)

    f32 = jnp.float32
    xp = jnp.zeros((n_pad, d_pad), x.dtype).at[:n, :d].set(x2d)
    w1p = jnp.zeros((d_pad, h_pad), f32).at[:d, :h].set(w1.astype(f32))
    w2p = jnp.zeros((h_pad, d_pad), f32).at[:h, :d].set(w2.astype(f32))
    b1p = jnp.zeros((1, h_pad), f32).at[0, :h].set(b1.astype(f32))
    b2p = jnp.zeros((1, d_pad), f32).at[0, :d].set(b2.astype(f32))
    gp = jnp.zeros((1, d_pad), f32).at[0, :d].set(gamma.astype(f32))
    bp = jnp.zeros((1, d_pad), f32).at[0, :d].set(beta.astype(f32))

    if matmul_dtype is not None:
        xp = xp.astype(matmul_dtype)
        w1p = w1p.astype(matmul_dtype)
        w2p = w2p.astype(matmul_dtype)

    grid = (n_pad // tile_n,)
    kernel = functools.partial(_fnn_kernel, d_true=float(d), eps=1e-5)

    row_spec = pl.BlockSpec((tile_n, d_pad), lambda i: (i, 0))

    def fixed(shape):
        # Weights / bias / LN params: same block for every row tile, so they
        # stay VMEM-resident across the whole grid.
        return pl.BlockSpec(shape, lambda i: (0, 0))

    out = pl.pallas_call(
        kernel,
        grid=grid,
        out_shape=jax.ShapeDtypeStruct((n_pad, d_pad), x.dtype),
        in_specs=[
            row_spec,               # x rows (pipelined / double-buffered)
            fixed((d_pad, h_pad)),  # W1^T
            fixed((1, h_pad)),      # b1
            fixed((h_pad, d_pad)),  # W2^T
            fixed((1, d_pad)),      # b2
            fixed((1, d_pad)),      # gamma
            fixed((1, d_pad)),      # beta
        ],
        out_specs=row_spec,
        compiler_params=pltpu.CompilerParams(
            # Independent row tiles: shard across TensorCores on v7x.
            dimension_semantics=("parallel",)),
    )(xp, w1p, b1p, w2p, b2p, gp, bp)

    return out[:n, :d].reshape(orig_shape)


# ----------------------------------------------------------------------------
# PositionEmbedding: x + pe[:, :x.size(1)]; dropout is the eval-mode identity.
# Per the perf review this is a ~1 KiB elementwise add, so it is NOT a
# standalone pallas_call (that would be 100% launch/DMA overhead) — it is a
# plain jnp add which XLA fuses into surrounding ops.
# ----------------------------------------------------------------------------
def make_position_table(input_dim, max_len=50, dtype=jnp.float32):
    # Deterministic sinusoidal table, identical to PositionEmbedding.__init__.
    position = jnp.arange(0.0, max_len, dtype=jnp.float32)[:, None]            # (L, 1)
    div_term = jnp.exp(jnp.arange(0.0, input_dim, 2.0, dtype=jnp.float32)
                       * -(math.log(10000.0) / input_dim))                     # (D/2,)
    pe = jnp.zeros((max_len, input_dim), dtype=jnp.float32)
    pe = pe.at[:, 0::2].set(jnp.sin(position * div_term))
    pe = pe.at[:, 1::2].set(jnp.cos(position * div_term))
    return pe.astype(dtype)                                                    # (L, D)


def position_embedding_forward(x, pe_table):
    """PositionEmbedding.forward on x of shape (1, S, D)."""
    # TODO(synk): training-mode nn.Dropout(0.1) is stochastic; eval semantics used.
    s = x.shape[1]
    return x + pe_table[None, :s, :].astype(x.dtype)


# ----------------------------------------------------------------------------
# Deterministic parameter construction (shapes from the module's __init__)
# ----------------------------------------------------------------------------
def init_fnn_params(key, input_dim, hid_state_dim, dtype=jnp.float32):
    k1, k2, k3, k4 = jax.random.split(key, 4)
    bound1 = 1.0 / math.sqrt(input_dim)
    bound2 = 1.0 / math.sqrt(hid_state_dim)
    # nn.Linear stores (out, in); we keep the transposed (in, out) layout.
    w1 = jax.random.uniform(k1, (input_dim, hid_state_dim), dtype, -bound1, bound1)
    b1 = jax.random.uniform(k2, (hid_state_dim,), dtype, -bound1, bound1)
    w2 = jax.random.uniform(k3, (hid_state_dim, input_dim), dtype, -bound2, bound2)
    b2 = jax.random.uniform(k4, (input_dim,), dtype, -bound2, bound2)
    gamma = jnp.ones((input_dim,), dtype)       # nn.LayerNorm weight
    beta = jnp.zeros((input_dim,), dtype)       # nn.LayerNorm bias
    return (w1, b1, w2, b2, gamma, beta)


def _fnn_reference(x, params):
    w1, b1, w2, b2, g, b = params
    hid = jnp.maximum(x @ w1 + b1, 0.0)
    y = hid @ w2 + b2 + x
    mu = y.mean(-1, keepdims=True)
    var = ((y - mu) ** 2).mean(-1, keepdims=True)
    return (y - mu) * jax.lax.rsqrt(var + 1e-5) * g + b


# TODO(synk): Embedding lookup, nn.GRU and nn.MultiheadAttention only appear in
# My_model.__init__ (which is not runnable PyTorch) and never in any forward();
# they are not reproduced here.


if __name__ == "__main__":
    key = jax.random.PRNGKey(0)
    k_fnn, k_facial, k_hid, k_big = jax.random.split(key, 4)

    # Shapes consistent with the module:
    #   facial-expression features: dim 17 (FNN(17, args.facial_dim))
    #   args.facial_dim = 32, args.batch_size = 8, args.rnn_hidden_dim = 32
    batch_size = 8
    facial_in_dim = 17
    facial_hid_dim = 32
    rnn_hidden_dim = 32

    # --- FNN(17, facial_dim) forward on synthetic facial features ------------
    fnn_params = init_fnn_params(k_fnn, facial_in_dim, facial_hid_dim)
    x_facial = jax.random.normal(k_facial, (batch_size, facial_in_dim), jnp.float32)
    facial_out = fnn_forward(x_facial, fnn_params)

    # A slightly larger batch to exercise the multi-tile row grid + padding.
    x_big = jax.random.normal(k_big, (80, facial_in_dim), jnp.float32)
    big_out = fnn_forward(x_big, fnn_params, tile_n=32)   # grid = (3,), rows padded

    # --- PositionEmbedding(rnn_hidden_dim) forward on a (1, B, H) hidden state
    gru_hid_state = jax.random.normal(k_hid, (1, batch_size, rnn_hidden_dim),
                                      jnp.float32)
    pe_table = make_position_table(rnn_hidden_dim, max_len=50)
    pe_out = position_embedding_forward(gru_hid_state, pe_table)

    jax.block_until_ready((facial_out, big_out, pe_out))

    # Sanity checks against plain-JAX references (same math, no Pallas).
    assert jnp.allclose(facial_out, _fnn_reference(x_facial, fnn_params),
                        atol=1e-5, rtol=1e-5)
    assert jnp.allclose(big_out, _fnn_reference(x_big, fnn_params),
                        atol=1e-5, rtol=1e-5)
    assert jnp.allclose(pe_out, gru_hid_state + pe_table[None, :batch_size, :],
                        atol=1e-6, rtol=1e-6)

    print("KERNEL_OK")
</pallas_src>

<mosaic_0001>
module attributes {stable_mosaic.version = 11 : i64} {
  func.func @_fnn_kernel(%arg0: i32, %arg1: memref<8x128xf32, #tpu.memory_space<vmem>>, %arg2: memref<128x128xf32, #tpu.memory_space<vmem>>, %arg3: memref<1x128xf32, #tpu.memory_space<vmem>>, %arg4: memref<128x128xf32, #tpu.memory_space<vmem>>, %arg5: memref<1x128xf32, #tpu.memory_space<vmem>>, %arg6: memref<1x128xf32, #tpu.memory_space<vmem>>, %arg7: memref<1x128xf32, #tpu.memory_space<vmem>>, %arg8: memref<8x128xf32, #tpu.memory_space<vmem>>) attributes {dimension_semantics = [#tpu.dimension_semantics<parallel>], iteration_bounds = array<i64: 1>, scalar_prefetch = 0 : i64, scratch_operands = 0 : i64, tpu.core_type = #tpu.core_type<tc>, window_params = [{transform_indices = @transform_0, window_bounds = array<i64: 8, 128>}, {pipeline_mode = #tpu.pipeline_mode<synchronous>, transform_indices = @transform_1, window_bounds = array<i64: 128, 128>}, {pipeline_mode = #tpu.pipeline_mode<synchronous>, transform_indices = @transform_2, window_bounds = array<i64: 1, 128>}, {pipeline_mode = #tpu.pipeline_mode<synchronous>, transform_indices = @transform_3, window_bounds = array<i64: 128, 128>}, {pipeline_mode = #tpu.pipeline_mode<synchronous>, transform_indices = @transform_4, window_bounds = array<i64: 1, 128>}, {pipeline_mode = #tpu.pipeline_mode<synchronous>, transform_indices = @transform_5, window_bounds = array<i64: 1, 128>}, {pipeline_mode = #tpu.pipeline_mode<synchronous>, transform_indices = @transform_6, window_bounds = array<i64: 1, 128>}, {transform_indices = @transform_7, window_bounds = array<i64: 8, 128>}]} {
    %c0 = arith.constant 0 : index
    %c0_0 = arith.constant 0 : index
    %0 = vector.load %arg1[%c0, %c0_0] : memref<8x128xf32, #tpu.memory_space<vmem>>, vector<8x128xf32>
    %c0_1 = arith.constant 0 : index
    %c0_2 = arith.constant 0 : index
    %1 = vector.load %arg2[%c0_1, %c0_2] : memref<128x128xf32, #tpu.memory_space<vmem>>, vector<128x128xf32>
    %cst = arith.constant dense<0.000000e+00> : vector<8x128xf32>
    %2 = tpu.matmul %0, %1, %cst {dimension_numbers = #tpu.dot_dimension_numbers<[1], [0], [0], [1], [0, 0, 1, 1], [], []>} : vector<8x128xf32>, vector<128x128xf32>, vector<8x128xf32> -> vector<8x128xf32>
    %c0_3 = arith.constant 0 : index
    %c0_4 = arith.constant 0 : index
    %3 = vector.load %arg3[%c0_3, %c0_4] : memref<1x128xf32, #tpu.memory_space<vmem>>, vector<1x128xf32>
    %4 = vector.broadcast %3 : vector<1x128xf32> to vector<8x128xf32>
    %5 = arith.addf %2, %4 : vector<8x128xf32>
    %cst_5 = arith.constant 0.000000e+00 : f32
    %6 = vector.broadcast %cst_5 : f32 to vector<8x128xf32>
    %7 = arith.maximumf %5, %6 : vector<8x128xf32>
    %c0_6 = arith.constant 0 : index
    %c0_7 = arith.constant 0 : index
    %8 = vector.load %arg4[%c0_6, %c0_7] : memref<128x128xf32, #tpu.memory_space<vmem>>, vector<128x128xf32>
    %cst_8 = arith.constant dense<0.000000e+00> : vector<8x128xf32>
    %9 = tpu.matmul %7, %8, %cst_8 {dimension_numbers = #tpu.dot_dimension_numbers<[1], [0], [0], [1], [0, 0, 1, 1], [], []>} : vector<8x128xf32>, vector<128x128xf32>, vector<8x128xf32> -> vector<8x128xf32>
    %c0_9 = arith.constant 0 : index
    %c0_10 = arith.constant 0 : index
    %10 = vector.load %arg5[%c0_9, %c0_10] : memref<1x128xf32, #tpu.memory_space<vmem>>, vector<1x128xf32>
    %11 = vector.broadcast %10 : vector<1x128xf32> to vector<8x128xf32>
    %12 = arith.addf %9, %11 : vector<8x128xf32>
    %13 = arith.addf %12, %0 : vector<8x128xf32>
    %cst_11 = arith.constant dense<0.000000e+00> : vector<8xf32>
    %14 = vector.multi_reduction <add>, %13, %cst_11 [1] : vector<8x128xf32> to vector<8xf32>
    %15 = vector.shape_cast %14 : vector<8xf32> to vector<8x1xf32>
    %cst_12 = arith.constant 0.0588235296 : f32
    %16 = vector.broadcast %cst_12 : f32 to vector<8x1xf32>
    %17 = arith.mulf %15, %16 : vector<8x1xf32>
    %18 = tpu.iota {dimensions = array<i32: 1>} : vector<8x128xi32>
    %19 = arith.sitofp %18 : vector<8x128xi32> to vector<8x128xf32>
    %cst_13 = arith.constant 1.700000e+01 : f32
    %20 = vector.broadcast %cst_13 : f32 to vector<8x128xf32>
    %21 = arith.cmpf olt, %19, %20 : vector<8x128xf32>
    %22 = vector.broadcast %17 : vector<8x1xf32> to vector<8x128xf32>
    %23 = arith.subf %13, %22 : vector<8x128xf32>
    %cst_14 = arith.constant 0.000000e+00 : f32
    %24 = vector.broadcast %cst_14 : f32 to vector<8x128xf32>
    %25 = arith.select %21, %23, %24 : vector<8x128xi1>, vector<8x128xf32>
    %26 = arith.mulf %25, %25 : vector<8x128xf32>
    %cst_15 = arith.constant dense<0.000000e+00> : vector<8xf32>
    %27 = vector.multi_reduction <add>, %26, %cst_15 [1] : vector<8x128xf32> to vector<8xf32>
    %28 = vector.shape_cast %27 : vector<8xf32> to vector<8x1xf32>
    %cst_16 = arith.constant 0.0588235296 : f32
    %29 = vector.broadcast %cst_16 : f32 to vector<8x1xf32>
    %30 = arith.mulf %28, %29 : vector<8x1xf32>
    %cst_17 = arith.constant 9.99999974E-6 : f32
    %31 = vector.broadcast %cst_17 : f32 to vector<8x1xf32>
    %32 = arith.addf %30, %31 : vector<8x1xf32>
    %33 = math.rsqrt %32 : vector<8x1xf32>
    %34 = vector.broadcast %33 : vector<8x1xf32> to vector<8x128xf32>
    %35 = arith.mulf %25, %34 : vector<8x128xf32>
    %c0_18 = arith.constant 0 : index
    %c0_19 = arith.constant 0 : index
    %36 = vector.load %arg6[%c0_18, %c0_19] : memref<1x128xf32, #tpu.memory_space<vmem>>, vector<1x128xf32>
    %37 = vector.broadcast %36 : vector<1x128xf32> to vector<8x128xf32>
    %38 = arith.mulf %35, %37 : vector<8x128xf32>
    %c0_20 = arith.constant 0 : index
    %c0_21 = arith.constant 0 : index
    %39 = vector.load %arg7[%c0_20, %c0_21] : memref<1x128xf32, #tpu.memory_space<vmem>>, vector<1x128xf32>
    %40 = vector.broadcast %39 : vector<1x128xf32> to vector<8x128xf32>
    %41 = arith.addf %38, %40 : vector<8x128xf32>
    %c0_22 = arith.constant 0 : index
    %c0_23 = arith.constant 0 : index
    %42 = vector.load %arg8[%c0_22, %c0_23] : memref<8x128xf32, #tpu.memory_space<vmem>>, vector<8x128xf32>
    tpu.vector_store %arg8[%c0_22, %c0_23], %41 {strides = array<i32>} : memref<8x128xf32, #tpu.memory_space<vmem>>, vector<8x128xf32>,
    return
  }
  func.func @transform_0(%arg0: i32) -> (i32, i32) {
    %c0_i32 = arith.constant 0 : i32
    %c0_i32_0 = arith.constant 0 : i32
    return %arg0, %c0_i32 : i32, i32
  }
  func.func @transform_1(%arg0: i32) -> (i32, i32) {
    %c0_i32 = arith.constant 0 : i32
    %c0_i32_0 = arith.constant 0 : i32
    %c0_i32_1 = arith.constant 0 : i32
    return %c0_i32, %c0_i32_0 : i32, i32
  }
  func.func @transform_2(%arg0: i32) -> (i32, i32) {
    %c0_i32 = arith.constant 0 : i32
    %c0_i32_0 = arith.constant 0 : i32
    %c0_i32_1 = arith.constant 0 : i32
    return %c0_i32, %c0_i32_0 : i32, i32
  }
  func.func @transform_3(%arg0: i32) -> (i32, i32) {
    %c0_i32 = arith.constant 0 : i32
    %c0_i32_0 = arith.constant 0 : i32
    %c0_i32_1 = arith.constant 0 : i32
    return %c0_i32, %c0_i32_0 : i32, i32
  }
  func.func @transform_4(%arg0: i32) -> (i32, i32) {
    %c0_i32 = arith.constant 0 : i32
    %c0_i32_0 = arith.constant 0 : i32
    %c0_i32_1 = arith.constant 0 : i32
    return %c0_i32, %c0_i32_0 : i32, i32
  }
  func.func @transform_5(%arg0: i32) -> (i32, i32) {
    %c0_i32 = arith.constant 0 : i32
    %c0_i32_0 = arith.constant 0 : i32
    %c0_i32_1 = arith.constant 0 : i32
    return %c0_i32, %c0_i32_0 : i32, i32
  }
  func.func @transform_6(%arg0: i32) -> (i32, i32) {
    %c0_i32 = arith.constant 0 : i32
    %c0_i32_0 = arith.constant 0 : i32
    %c0_i32_1 = arith.constant 0 : i32
    return %c0_i32, %c0_i32_0 : i32, i32
  }
  func.func @transform_7(%arg0: i32) -> (i32, i32) {
    %c0_i32 = arith.constant 0 : i32
    %c0_i32_0 = arith.constant 0 : i32
    return %arg0, %c0_i32 : i32, i32
  }
}

</mosaic_0001>

<llo_original>
// kernel: tpu_custom_call.1
$region0: #{tpu_custom_call.1}
  #allocation0 [shape = 'u32[]', space=smem, size = 0x4, offset = 0x4, fixed_abs, tag = 'smem constant byte address 0x4 - core index']
  #allocation1 [shape = 'u32[144,128]{1,0:T(1,128)}', space=vmem, size = 0x12000, scoped, tag = 'internal scratch']
  %s0 = inlined_call_operand.hbm [shape: f32[8,128], index: 0, kind: input, shape index: {}]
  %s1 = inlined_call_operand.hbm [shape: f32[128,128], index: 1, kind: input, shape index: {}]
  %s2 = inlined_call_operand.vmem [shape: f32[1,128], index: 2, kind: input, shape index: {}]
  %s3 = inlined_call_operand.hbm [shape: f32[128,128], index: 3, kind: input, shape index: {}]
  %s4 = inlined_call_operand.vmem [shape: f32[1,128], index: 4, kind: input, shape index: {}]
  %s5 = inlined_call_operand.vmem [shape: f32[1,128], index: 5, kind: input, shape index: {}]
  %s6 = inlined_call_operand.vmem [shape: f32[1,128], index: 6, kind: input, shape index: {}]
  %s7 = inlined_call_operand.hbm [shape: f32[8,128], index: 7, kind: output, shape index: {}]
  %s8 = sld [smem:[#allocation0]]
  $region50: #{tpu_custom_call.1} parent=0
    _
  %s10 = ssub.s32 1, %s8
  %s11 = scalar_select 0, %s10, %s8
  $region1: #{tpu_custom_call.1} parent=0
    #allocation2 [shape = 'u8[4096]{0}', space=vmem, size = 0x1000, scoped, tag = 'input window, operand 0, single buffered']
    #allocation3 [shape = 's32[1]{0}', space=sflag, size = 0x4, scoped, tag = 'scoped memory for tpu_custom_call.1']
    #allocation4 [shape = 's32[1]{0}', space=sflag, size = 0x4, scoped, tag = 'scoped memory for tpu_custom_call.1']
    #allocation5 [shape = 'u8[65536]{0}', space=vmem, size = 0x10000, scoped, tag = 'input window, operand 1, single buffered']
    #allocation6 [shape = 's32[1]{0}', space=sflag, size = 0x4, scoped, tag = 'scoped memory for tpu_custom_call.1']
    #allocation7 [shape = 'u8[65536]{0}', space=vmem, size = 0x10000, scoped, tag = 'input window, operand 3, single buffered']
    #allocation8 [shape = 'u8[4096]{0}', space=vmem, size = 0x1000, scoped, tag = 'output window, operand 0, single buffered']
    %12 = vsyncpa [#allocation3], 0
    %13 = vsyncpa [#allocation6], 0
    %14 = vsyncpa [#allocation4], 0
    // Predicated region
    $region2: #{tpu_custom_call.1} parent=1 // pred_check
      _
    $region3: #{tpu_custom_call.1} parent=1 // pred_check_branch
      %16 = sbr.rel (0) target = $region5
    $region4: #{tpu_custom_call.1} parent=1 // pred_region
      %s18 = ssub.s32 128, 128
      %19 = vsyncadd [#allocation3], %s18
      %s21 = sshll.u32 [#allocation2], 4
      %s22 = int_to_ptr.vmem [resolvable:$true] %s21
      %24 = dma.hbm_to_vmem [thread:$0]  %s0, 128, %s22, [#allocation3]
    $region5: #{tpu_custom_call.1} parent=1 // pred_fallthru
      _
    // Predicated region
    $region6: #{tpu_custom_call.1} parent=1 // pred_check
      _
    $region7: #{tpu_custom_call.1} parent=1 // pred_check_branch
      %26 = sbr.rel (0) target = $region9
    $region8: #{tpu_custom_call.1} parent=1 // pred_region
      %s28 = ssub.s32 2048, 2048
      %29 = vsyncadd [#allocation6], %s28
      %s30 = sshll.u32 [#allocation5], 4
      %s31 = int_to_ptr.vmem [resolvable:$true] %s30
      %36 = dma.hbm_to_vmem [thread:$0]  %s1, 2048, %s31, [#allocation6], 128, 128, 8
    $region9: #{tpu_custom_call.1} parent=1 // pred_fallthru
      _
    // Predicated region
    $region10: #{tpu_custom_call.1} parent=1 // pred_check
      _
    $region11: #{tpu_custom_call.1} parent=1 // pred_check_branch
      %38 = sbr.rel (0) target = $region13
    $region12: #{tpu_custom_call.1} parent=1 // pred_region
      _
    $region13: #{tpu_custom_call.1} parent=1 // pred_fallthru
      _
    // Predicated region
    $region14: #{tpu_custom_call.1} parent=1 // pred_check
      _
    $region15: #{tpu_custom_call.1} parent=1 // pred_check_branch
      %40 = sbr.rel (0) target = $region17
    $region16: #{tpu_custom_call.1} parent=1 // pred_region
      %s42 = ssub.s32 2048, 2048
      %43 = vsyncadd [#allocation6], %s42
      %s44 = sshll.u32 [#allocation7], 4
      %s45 = int_to_ptr.vmem [resolvable:$true] %s44
      %50 = dma.hbm_to_vmem [thread:$0]  %s3, 2048, %s45, [#allocation6], 128, 128, 8
    $region17: #{tpu_custom_call.1} parent=1 // pred_fallthru
      _
    // Predicated region
    $region18: #{tpu_custom_call.1} parent=1 // pred_check
      _
    $region19: #{tpu_custom_call.1} parent=1 // pred_check_branch
      %52 = sbr.rel (0) target = $region21
    $region20: #{tpu_custom_call.1} parent=1 // pred_region
      _
    $region21: #{tpu_custom_call.1} parent=1 // pred_fallthru
      _
    // Predicated region
    $region22: #{tpu_custom_call.1} parent=1 // pred_check
      _
    $region23: #{tpu_custom_call.1} parent=1 // pred_check_branch
      %54 = sbr.rel (0) target = $region25
    $region24: #{tpu_custom_call.1} parent=1 // pred_region
      _
    $region25: #{tpu_custom_call.1} parent=1 // pred_fallthru
      _
    // Predicated region
    $region26: #{tpu_custom_call.1} parent=1 // pred_check
      _
    $region27: #{tpu_custom_call.1} parent=1 // pred_check_branch
      %56 = sbr.rel (0) target = $region29
    $region28: #{tpu_custom_call.1} parent=1 // pred_region
      _
    $region29: #{tpu_custom_call.1} parent=1 // pred_fallthru
      _
    // Predicated region
    $region30: #{tpu_custom_call.1} parent=1 // pred_check
      _
    $region31: #{tpu_custom_call.1} parent=1 // pred_check_branch
      %58 = sbr.rel (0) target = $region33
    $region32: #{tpu_custom_call.1} parent=1 // pred_region
      %59 = dma.done [#allocation3], 128
    $region33: #{tpu_custom_call.1} parent=1 // pred_fallthru
      _
    // Predicated region
    $region34: #{tpu_custom_call.1} parent=1 // pred_check
      _
    $region35: #{tpu_custom_call.1} parent=1 // pred_check_branch
      %61 = sbr.rel (0) target = $region37
    $region36: #{tpu_custom_call.1} parent=1 // pred_region
      %62 = dma.done [#allocation6], 2048
    $region37: #{tpu_custom_call.1} parent=1 // pred_fallthru
      _
    // Predicated region
    $region38: #{tpu_custom_call.1} parent=1 // pred_check
      _
    $region39: #{tpu_custom_call.1} parent=1 // pred_check_branch
      %64 = sbr.rel (0) target = $region41
    $region40: #{tpu_custom_call.1} parent=1 // pred_region
      %65 = dma.done [#allocation6], 2048
    $region41: #{tpu_custom_call.1} parent=1 // pred_fallthru
      _
    %v66 = vld [vmem:[#allocation2] sm:$0xff]
    %v67 = vld [vmem:[#allocation5] sm:$0xff]
    %v68 = vld [vmem:[#allocation5 + $0x8] sm:$0xff]
    %v69 = vld [vmem:[#allocation5 + $0x10] sm:$0xff]
    %v70 = vld [vmem:[#allocation5 + $0x18] sm:$0xff]
    %v71 = vld [vmem:[#allocation5 + $0x20] sm:$0xff]
    %v72 = vld [vmem:[#allocation5 + $0x28] sm:$0xff]
    %v73 = vld [vmem:[#allocation5 + $0x30] sm:$0xff]
    %v74 = vld [vmem:[#allocation5 + $0x38] sm:$0xff]
    %v75 = vld [vmem:[#allocation5 + $0x40] sm:$0xff]
    %v76 = vld [vmem:[#allocation5 + $0x48] sm:$0xff]
    %v77 = vld [vmem:[#allocation5 + $0x50] sm:$0xff]
    %v78 = vld [vmem:[#allocation5 + $0x58] sm:$0xff]
    %v79 = vld [vmem:[#allocation5 + $0x60] sm:$0xff]
    %v80 = vld [vmem:[#allocation5 + $0x68] sm:$0xff]
    %v81 = vld [vmem:[#allocation5 + $0x70] sm:$0xff]
    %v82 = vld [vmem:[#allocation5 + $0x78] sm:$0xff]
    %v83 = vld [vmem:[%s2] sm:$0x1]
    %v85 = vlaneseq
    %v86 = vshrl.u32 %v85, 7
    %v87 = vsub.s32 0, %v86
    %v88 = vrot.slane %v83, %v87
    %90 = vmatprep.subr.mxu0 0.0
    %91 = vmatpush1.msra.mxu0 %v67
    %92 = vmatprep.subr.mxu0 0.0
    %93 = vmatpush1.msra.mxu0 %v68
    %94 = vmatprep.subr.mxu0 0.0
    %95 = vmatpush1.msra.mxu0 %v69
    %96 = vmatprep.subr.mxu0 0.0
    %97 = vmatpush1.msra.mxu0 %v70
    %98 = vmatprep.subr.mxu0 0.0
    %99 = vmatpush1.msra.mxu0 %v71
    %100 = vmatprep.subr.mxu0 0.0
    %101 = vmatpush1.msra.mxu0 %v72
    %102 = vmatprep.subr.mxu0 0.0
    %103 = vmatpush1.msra.mxu0 %v73
    %104 = vmatprep.subr.mxu0 0.0
    %105 = vmatpush1.msra.mxu0 %v74
    %106 = vmatprep.subr.mxu0 0.0
    %107 = vmatpush1.msra.mxu0 %v75
    %108 = vmatprep.subr.mxu0 0.0
    %109 = vmatpush1.msra.mxu0 %v76
    %110 = vmatprep.subr.mxu0 0.0
    %111 = vmatpush1.msra.mxu0 %v77
    %112 = vmatprep.subr.mxu0 0.0
    %113 = vmatpush1.msra.mxu0 %v78
    %114 = vmatprep.subr.mxu0 0.0
    %115 = vmatpush1.msra.mxu0 %v79
    %116 = vmatprep.subr.mxu0 0.0
    %117 = vmatpush1.msra.mxu0 %v80
    %118 = vmatprep.subr.mxu0 0.0
    %119 = vmatpush1.msra.mxu0 %v81
    %120 = vmatprep.subr.mxu0 0.0
    %121 = vmatpush1.msra.mxu0 %v82
    %122 = vmatprep.subr.mxu0 0.0
    %123 = vmatpush1.msra.mxu0 0.0
    %124 = vmatprep.subr.mxu0 0.0
    %125 = vmatpush1.msra.mxu0 0.0
    %126 = vmatprep.subr.mxu0 0.0
    %127 = vmatpush1.msra.mxu0 0.0
    %128 = vmatprep.subr.mxu0 0.0
    %129 = vmatpush1.msra.mxu0 0.0
    %130 = vmatprep.subr.mxu0 0.0
    %131 = vmatpush1.msra.mxu0 0.0
    %132 = vmatprep.subr.mxu0 0.0
    %133 = vmatpush1.msra.mxu0 0.0
    %134 = vmatprep.subr.mxu0 0.0
    %135 = vmatpush1.msra.mxu0 0.0
    %136 = vmatprep.subr.mxu0 0.0
    %137 = vmatpush1.msra.mxu0 0.0
    %138 = vmatprep.subr.mxu0 0.0
    %139 = vmatpush1.msra.mxu0 0.0
    %140 = vmatprep.subr.mxu0 0.0
    %141 = vmatpush1.msra.mxu0 0.0
    %142 = vmatprep.subr.mxu0 0.0
    %143 = vmatpush1.msra.mxu0 0.0
    %144 = vmatprep.subr.mxu0 0.0
    %145 = vmatpush1.msra.mxu0 0.0
    %146 = vmatprep.subr.mxu0 0.0
    %147 = vmatpush1.msra.mxu0 0.0
    %148 = vmatprep.subr.mxu0 0.0
    %149 = vmatpush1.msra.mxu0 0.0
    %150 = vmatprep.subr.mxu0 0.0
    %151 = vmatpush1.msra.mxu0 0.0
    %152 = vmatprep.subr.mxu0 0.0
    %153 = vmatpush1.msra.mxu0 0.0
    %154 = vmatprep.mubr.f32.mxu0 0.0
    %155 = vmatmul.mubr.f32.gmra.mrb[0].mxu0 %v66
    %v156 = vpop.f32.mrb[0].mxu0
    %v157 = vadd.f32 %v88, %v156
    %v158 = vpop.f32.mrb[0].mxu0
    %159 = vdwg.mxu0
    %v160 = vmax.f32 %v157, 0.0
    %v161 = vld [vmem:[#allocation7] sm:$0xff]
    %v162 = vld [vmem:[#allocation7 + $0x8] sm:$0xff]
    %v163 = vld [vmem:[#allocation7 + $0x10] sm:$0xff]
    %v164 = vld [vmem:[#allocation7 + $0x18] sm:$0xff]
    %v165 = vld [vmem:[#allocation7 + $0x20] sm:$0xff]
    %v166 = vld [vmem:[#allocation7 + $0x28] sm:$0xff]
    %v167 = vld [vmem:[#allocation7 + $0x30] sm:$0xff]
    %v168 = vld [vmem:[#allocation7 + $0x38] sm:$0xff]
    %v169 = vld [vmem:[#allocation7 + $0x40] sm:$0xff]
    %v170 = vld [vmem:[#allocation7 + $0x48] sm:$0xff]
    %v171 = vld [vmem:[#allocation7 + $0x50] sm:$0xff]
    %v172 = vld [vmem:[#allocation7 + $0x58] sm:$0xff]
    %v173 = vld [vmem:[#allocation7 + $0x60] sm:$0xff]
    %v174 = vld [vmem:[#allocation7 + $0x68] sm:$0xff]
    %v175 = vld [vmem:[#allocation7 + $0x70] sm:$0xff]
    %v176 = vld [vmem:[#allocation7 + $0x78] sm:$0xff]
    %v177 = vld [vmem:[%s4] sm:$0x1]
    %v179 = vlaneseq
    %v180 = vshrl.u32 %v179, 7
    %v181 = vsub.s32 0, %v180
    %v182 = vrot.slane %v177, %v181
    %184 = vmatprep.subr.mxu0 0.0
    %185 = vmatpush1.msra.mxu0 %v161
    %186 = vmatprep.subr.mxu0 0.0
    %187 = vmatpush1.msra.mxu0 %v162
    %188 = vmatprep.subr.mxu0 0.0
    %189 = vmatpush1.msra.mxu0 %v163
    %190 = vmatprep.subr.mxu0 0.0
    %191 = vmatpush1.msra.mxu0 %v164
    %192 = vmatprep.subr.mxu0 0.0
    %193 = vmatpush1.msra.mxu0 %v165
    %194 = vmatprep.subr.mxu0 0.0
    %195 = vmatpush1.msra.mxu0 %v166
    %196 = vmatprep.subr.mxu0 0.0
    %197 = vmatpush1.msra.mxu0 %v167
    %198 = vmatprep.subr.mxu0 0.0
    %199 = vmatpush1.msra.mxu0 %v168
    %200 = vmatprep.subr.mxu0 0.0
    %201 = vmatpush1.msra.mxu0 %v169
    %202 = vmatprep.subr.mxu0 0.0
    %203 = vmatpush1.msra.mxu0 %v170
    %204 = vmatprep.subr.mxu0 0.0
    %205 = vmatpush1.msra.mxu0 %v171
    %206 = vmatprep.subr.mxu0 0.0
    %207 = vmatpush1.msra.mxu0 %v172
    %208 = vmatprep.subr.mxu0 0.0
    %209 = vmatpush1.msra.mxu0 %v173
    %210 = vmatprep.subr.mxu0 0.0
    %211 = vmatpush1.msra.mxu0 %v174
    %212 = vmatprep.subr.mxu0 0.0
    %213 = vmatpush1.msra.mxu0 %v175
    %214 = vmatprep.subr.mxu0 0.0
    %215 = vmatpush1.msra.mxu0 %v176
    %216 = vmatprep.subr.mxu0 0.0
    %217 = vmatpush1.msra.mxu0 0.0
    %218 = vmatprep.subr.mxu0 0.0
    %219 = vmatpush1.msra.mxu0 0.0
    %220 = vmatprep.subr.mxu0 0.0
    %221 = vmatpush1.msra.mxu0 0.0
    %222 = vmatprep.subr.mxu0 0.0
    %223 = vmatpush1.msra.mxu0 0.0
    %224 = vmatprep.subr.mxu0 0.0
    %225 = vmatpush1.msra.mxu0 0.0
    %226 = vmatprep.subr.mxu0 0.0
    %227 = vmatpush1.msra.mxu0 0.0
    %228 = vmatprep.subr.mxu0 0.0
    %229 = vmatpush1.msra.mxu0 0.0
    %230 = vmatprep.subr.mxu0 0.0
    %231 = vmatpush1.msra.mxu0 0.0
    %232 = vmatprep.subr.mxu0 0.0
    %233 = vmatpush1.msra.mxu0 0.0
    %234 = vmatprep.subr.mxu0 0.0
    %235 = vmatpush1.msra.mxu0 0.0
    %236 = vmatprep.subr.mxu0 0.0
    %237 = vmatpush1.msra.mxu0 0.0
    %238 = vmatprep.subr.mxu0 0.0
    %239 = vmatpush1.msra.mxu0 0.0
    %240 = vmatprep.subr.mxu0 0.0
    %241 = vmatpush1.msra.mxu0 0.0
    %242 = vmatprep.subr.mxu0 0.0
    %243 = vmatpush1.msra.mxu0 0.0
    %244 = vmatprep.subr.mxu0 0.0
    %245 = vmatpush1.msra.mxu0 0.0
    %246 = vmatprep.subr.mxu0 0.0
    %247 = vmatpush1.msra.mxu0 0.0
    %248 = vmatprep.mubr.f32.mxu0 0.0
    %249 = vmatmul.mubr.f32.gmra.mrb[0].mxu0 %v160
    %v250 = vpop.f32.mrb[0].mxu0
    %v251 = vadd.f32 %v182, %v250
    %v252 = vpop.f32.mrb[0].mxu0
    %253 = vdwg.mxu0
    %v254 = vadd.f32 %v251, %v66
    %255 = vadd.xlane.f32.xlu0 %v254
    %v256 = vpop.xlane.xlu0 %255
    %v257 = vmul.f32 %v256, 0.05882353
    %v258 = vlaneseq
    %v259 = vand.u32 %v258, 127
    %v260 = vcvt.s32.f32 %v259
    %vm261 = vcmp.lt.f32.partialorder %v260, 17.0
    %v262 = vsub.f32 %v254, %v257
    %v263 = vsel %vm261, %v262, 0.0
    %v264 = vmul.f32 %v263, %v263
    %265 = vadd.xlane.f32.xlu0 %v264
    %v266 = vpop.xlane.xlu0 %265
    %v267 = vmul.f32 %v266, 0.05882353
    %v268 = vadd.f32 %v267, 1e-05
    %v269 = vrsqrt.pop %v268
    %v270 = vmul.f32 %v263, %v269
    %v271 = vld [vmem:[%s5] sm:$0x1]
    %v273 = vlaneseq
    %v274 = vshrl.u32 %v273, 7
    %v275 = vsub.s32 0, %v274
    %v276 = vrot.slane %v271, %v275
    %v278 = vmul.f32 %v270, %v276
    %v279 = vld [vmem:[%s6] sm:$0x1]
    %v281 = vlaneseq
    %v282 = vshrl.u32 %v281, 7
    %v283 = vsub.s32 0, %v282
    %v284 = vrot.slane %v279, %v283
    %v286 = vadd.f32 %v278, %v284
    %287 = vst [vmem:[#allocation8] sm:$0xff] %v286
    // Predicated region
    $region42: #{tpu_custom_call.1} parent=1 // pred_check
      _
    $region43: #{tpu_custom_call.1} parent=1 // pred_check_branch
      %289 = sbr.rel (0) target = $region45
    $region44: #{tpu_custom_call.1} parent=1 // pred_region
      %s291 = ssub.s32 128, 128
      %292 = vsyncadd [#allocation4], %s291
      %s294 = sshll.u32 [#allocation8], 4
      %s295 = int_to_ptr.vmem [resolvable:$true] %s294
      %297 = dma.vmem_to_hbm [thread:$0]  %s295, 128, %s7, [#allocation4]
    $region45: #{tpu_custom_call.1} parent=1 // pred_fallthru
      _
    // Predicated region
    $region46: #{tpu_custom_call.1} parent=1 // pred_check
      _
    $region47: #{tpu_custom_call.1} parent=1 // pred_check_branch
      %299 = sbr.rel (0) target = $region49
    $region48: #{tpu_custom_call.1} parent=1 // pred_region
      %300 = dma.done [#allocation4], 128
    $region49: #{tpu_custom_call.1} parent=1 // pred_fallthru
      _
    %301 = vsyncpa [#allocation3], 1
    %302 = vsyncpa [#allocation6], 1
    %303 = vsyncpa [#allocation4], 1

</llo_original>
